<compile_context>
chip_gen: v7x
topology: tpu7x:2x2x1
jax: 0.10.0
libtpu: 0.0.40
codegen_flags: <defaults>
</compile_context>

<pallas_src>
import functools

import jax
import jax.numpy as jnp
from jax import lax
from jax.experimental import pallas as pl
from jax.experimental.pallas import tpu as pltpu


def _round_up(x, m):
    return (x + m - 1) // m * m


def _vmem_capacity_bytes():
    try:
        info = pltpu.get_tpu_info()
        return int(getattr(info, "vmem_capacity_bytes", 64 << 20))
    except Exception:
        return 64 << 20  # conservative (v7x physical VMEM)


def _pad_to(x, shape, dtype):
    """Zero-pad x into `shape` with dtype `dtype`; no-op copy if already matching."""
    x = x.astype(dtype)
    if tuple(x.shape) == tuple(shape):
        return x
    out = jnp.zeros(shape, dtype)
    return out.at[tuple(slice(0, s) for s in x.shape)].set(x)


def gcn_layer_kernel(h_ref, a_ref, wt_ref, b_ref, out_ref):
    # One grid step processes bt graphs.
    bt, l, c = h_ref.shape
    out_dim = out_ref.shape[-1]

    # --- Linear with BatchNorm folded into W/b (done in the wrapper) ---------
    # Flatten (bt, l) onto the sublane axis: one lane-dense MXU matmul
    # (bt*l, c) @ (c, out_pad) + b.
    h = h_ref[...].reshape(bt * l, c)
    xw = jnp.dot(h, wt_ref[...], preferred_element_type=jnp.float32) + b_ref[...]
    xw = xw.reshape(bt, l, out_dim)                       # (bt, l, out) f32

    # --- Symmetric-normalized aggregation, without materializing A + I -------
    a = a_ref[...]                                        # (bt, l, l), f32 or bf16
    d = jnp.sum(a.astype(jnp.float32), axis=2, keepdims=True) + 1.0   # rowsum(A+I)
    d_inv_sqrt = lax.rsqrt(d)                             # (bt, l, 1)
    d_inv = d_inv_sqrt * d_inv_sqrt                       # 1/d, one VALU mul

    # A_hat @ XW = d^{-1/2} * (A @ (d^{-1/2} * XW)) + d^{-1} * XW
    xw_scaled = (d_inv_sqrt * xw).astype(a.dtype)         # O(l*out), not O(l*l)
    agg = jnp.einsum('bij,bjo->bio', a, xw_scaled,
                     preferred_element_type=jnp.float32)  # batched MXU matmul
    out = d_inv_sqrt * agg + d_inv * xw

    # LeakyReLU (default negative_slope = 0.01)
    out = jnp.where(out >= 0.0, out, 0.01 * out)
    out_ref[...] = out.astype(out_ref.dtype)


def gcn_layer(H, A, gamma, beta, W, b, eps=1e-5, use_bf16_mxu=False):
    batch, l, c = H.shape
    out_dim = W.shape[0]

    # ---- BatchNorm1d training-mode statistics (global reduction -> plain JAX),
    #      folded into the Linear weight / bias. ------------------------------
    Hf = H.reshape(batch * l, c).astype(jnp.float32)
    mean = jnp.mean(Hf, axis=0)
    var = jnp.mean((Hf - mean) ** 2, axis=0)     # biased var, as PyTorch BN normalizes
    scale = gamma.astype(jnp.float32) * lax.rsqrt(var + eps)
    shift = beta.astype(jnp.float32) - mean * scale
    Wt = W.astype(jnp.float32).T                            # (c, out)
    Wt_fold = scale[:, None] * Wt                           # absorbs BN scale
    b_fold = b.astype(jnp.float32) + shift @ Wt             # absorbs BN shift

    # ---- Layout decisions ----------------------------------------------------
    # Node axis: sublane-aligned; 128-align only when l is large enough that the
    # relative blow-up is small (lane-dense A / MXU-aligned K for the aggregation).
    l_pad = _round_up(l, 128) if l >= 96 else _round_up(l, 8)
    # Channel axis of H stays unpadded (block last-dim == full array dim is legal;
    # padding c to 128 would multiply H's HBM bytes for a memory-bound kernel).
    # Output axis padded to 128 -> unmasked full vector stores.
    o_pad = _round_up(out_dim, 128)

    in_dtype = jnp.bfloat16 if use_bf16_mxu else jnp.float32
    in_b = 2 if use_bf16_mxu else 4

    # ---- VMEM budget (includes kernel temporaries) and bt selection ---------
    vmem_cap = _vmem_capacity_bytes()
    h_tile = l_pad * c * in_b
    a_tile = l_pad * l_pad * in_b
    o_tile = l_pad * o_pad * 4
    # temporaries per graph: xw (f32), agg (f32), xw_scaled (in_dtype), slack for h copy
    tmp_bytes = l_pad * o_pad * (4 + 4 + in_b) + l_pad * c * 4
    per_graph_bytes = 2 * (h_tile + a_tile + o_tile) + tmp_bytes   # 2x = double-buffer
    param_bytes = 2 * (c * o_pad * in_b + o_pad * 4)

    budget = max(per_graph_bytes, int(0.6 * vmem_cap) - param_bytes - (2 << 20))
    bt_max = max(1, min(batch, budget // per_graph_bytes))
    if batch >= 2:
        # keep >= 2 grid steps so v7x's two TensorCores both get work
        bt_max = max(1, min(bt_max, batch // 2))
    n_steps = -(-batch // bt_max)
    bt = -(-batch // n_steps)               # near-divisor of batch -> minimal padding waste
    batch_pad = _round_up(batch, bt)

    needed = bt * per_graph_bytes + param_bytes + (2 << 20)
    vmem_limit = int(min(int(0.85 * vmem_cap), max(needed, 16 << 20)))

    # ---- Padding (skipped when already aligned); bf16 cast fused into the pad.
    # Zero padding is exact: padded node rows/cols have zero adjacency (d = 1)
    # and are sliced off at the end.
    Hp = _pad_to(H, (batch_pad, l_pad, c), in_dtype)
    Ap = _pad_to(A, (batch_pad, l_pad, l_pad), in_dtype)
    Wt_p = _pad_to(Wt_fold, (c, o_pad), in_dtype)           # pre-transposed, pre-cast
    b_p = _pad_to(b_fold.reshape(1, out_dim), (1, o_pad), jnp.float32)

    # TODO(synk): for graphs whose (l_pad, l_pad) adjacency tile exceeds the VMEM
    # budget, add a node-row-tiled grid axis (A block (bt, TL, l_pad)).
    out = pl.pallas_call(
        gcn_layer_kernel,
        out_shape=jax.ShapeDtypeStruct((batch_pad, l_pad, o_pad), jnp.float32),
        grid_spec=pltpu.PrefetchScalarGridSpec(
            num_scalar_prefetch=0,
            grid=(batch_pad // bt,),
            in_specs=[
                pl.BlockSpec((bt, l_pad, c), lambda i: (i, 0, 0)),       # H
                pl.BlockSpec((bt, l_pad, l_pad), lambda i: (i, 0, 0)),   # A
                pl.BlockSpec((c, o_pad), lambda i: (0, 0)),              # folded W^T
                pl.BlockSpec((1, o_pad), lambda i: (0, 0)),              # folded bias
            ],
            out_specs=pl.BlockSpec((bt, l_pad, o_pad), lambda i: (i, 0, 0)),
        ),
        compiler_params=pltpu.CompilerParams(
            dimension_semantics=("parallel",),
            vmem_limit_bytes=vmem_limit,
        ),
    )(Hp, Ap, Wt_p, b_p)

    return out[:batch, :l, :out_dim]


def gcn_layer_reference(H, A, gamma, beta, W, b, eps=1e-5):
    batch, l, c = H.shape
    A2 = A + jnp.eye(l, dtype=A.dtype)
    Hf = H.reshape(batch * l, c)
    mean = jnp.mean(Hf, axis=0)
    var = jnp.mean((Hf - mean) ** 2, axis=0)
    Hbn = ((Hf - mean) / jnp.sqrt(var + eps) * gamma + beta).reshape(batch, l, c)
    D = A2.sum(2)
    Dinv = D ** -0.5
    D_hat = jax.vmap(jnp.diag)(Dinv)
    A_hat = D_hat @ (A2 @ D_hat)
    out = A_hat @ (Hbn @ W.T + b)
    return jnp.where(out >= 0, out, 0.01 * out)


if __name__ == "__main__":
    key = jax.random.PRNGKey(0)
    k_h, k_a, k_w, k_b, k_g, k_be = jax.random.split(key, 6)

    batch, nodes, input_dim, output_dim = 2, 16, 32, 16

    H = jax.random.normal(k_h, (batch, nodes, input_dim), dtype=jnp.float32)
    Ar = jax.random.uniform(k_a, (batch, nodes, nodes), dtype=jnp.float32)
    A = 0.5 * (Ar + jnp.swapaxes(Ar, 1, 2))             # nonneg symmetric adjacency

    # Deterministic synthetic parameters (shapes from the module __init__).
    lim = 1.0 / jnp.sqrt(jnp.float32(input_dim))
    W = jax.random.uniform(k_w, (output_dim, input_dim), minval=-lim, maxval=lim,
                           dtype=jnp.float32)
    b = jax.random.uniform(k_b, (output_dim,), minval=-lim, maxval=lim,
                           dtype=jnp.float32)
    gamma = jax.random.uniform(k_g, (input_dim,), minval=0.5, maxval=1.5,
                               dtype=jnp.float32)
    beta = jax.random.uniform(k_be, (input_dim,), minval=-0.5, maxval=0.5,
                              dtype=jnp.float32)
    # Note: sigma1 and GCN_liner_theta_1 exist in __init__ but are unused in forward().

    out = gcn_layer(H, A, gamma, beta, W, b)
    out = jax.block_until_ready(out)

    ref = gcn_layer_reference(H, A, gamma, beta, W, b)
    assert out.shape == (batch, nodes, output_dim)
    assert jnp.allclose(out, ref, rtol=1e-4, atol=1e-4), "mismatch vs reference"

    print("KERNEL_OK")
</pallas_src>

<mosaic_0001>
module attributes {stable_mosaic.version = 11 : i64} {
  func.func @gcn_layer_kernel(%arg0: i32, %arg1: memref<1x16x32xf32, #tpu.memory_space<vmem>>, %arg2: memref<1x16x16xf32, #tpu.memory_space<vmem>>, %arg3: memref<32x128xf32, #tpu.memory_space<vmem>>, %arg4: memref<1x128xf32, #tpu.memory_space<vmem>>, %arg5: memref<1x16x128xf32, #tpu.memory_space<vmem>>) attributes {dimension_semantics = [#tpu.dimension_semantics<parallel>], iteration_bounds = array<i64: 2>, scalar_prefetch = 0 : i64, scratch_operands = 0 : i64, tpu.core_type = #tpu.core_type<tc>, window_params = [{transform_indices = @transform_0, window_bounds = array<i64: 1, 16, 32>}, {transform_indices = @transform_1, window_bounds = array<i64: 1, 16, 16>}, {pipeline_mode = #tpu.pipeline_mode<synchronous>, transform_indices = @transform_2, window_bounds = array<i64: 32, 128>}, {pipeline_mode = #tpu.pipeline_mode<synchronous>, transform_indices = @transform_3, window_bounds = array<i64: 1, 128>}, {transform_indices = @transform_4, window_bounds = array<i64: 1, 16, 128>}]} {
    %c0 = arith.constant 0 : index
    %c0_0 = arith.constant 0 : index
    %c0_1 = arith.constant 0 : index
    %0 = vector.load %arg1[%c0, %c0_0, %c0_1] : memref<1x16x32xf32, #tpu.memory_space<vmem>>, vector<1x16x32xf32>
    %1 = vector.shape_cast %0 : vector<1x16x32xf32> to vector<16x32xf32>
    %c0_2 = arith.constant 0 : index
    %c0_3 = arith.constant 0 : index
    %2 = vector.load %arg3[%c0_2, %c0_3] : memref<32x128xf32, #tpu.memory_space<vmem>>, vector<32x128xf32>
    %cst = arith.constant dense<0.000000e+00> : vector<16x128xf32>
    %3 = tpu.matmul %1, %2, %cst {dimension_numbers = #tpu.dot_dimension_numbers<[1], [0], [0], [1], [0, 0, 1, 1], [], []>} : vector<16x32xf32>, vector<32x128xf32>, vector<16x128xf32> -> vector<16x128xf32>
    %c0_4 = arith.constant 0 : index
    %c0_5 = arith.constant 0 : index
    %4 = vector.load %arg4[%c0_4, %c0_5] : memref<1x128xf32, #tpu.memory_space<vmem>>, vector<1x128xf32>
    %5 = vector.broadcast %4 : vector<1x128xf32> to vector<16x128xf32>
    %6 = arith.addf %3, %5 : vector<16x128xf32>
    %7 = vector.shape_cast %6 : vector<16x128xf32> to vector<1x16x128xf32>
    %c0_6 = arith.constant 0 : index
    %c0_7 = arith.constant 0 : index
    %c0_8 = arith.constant 0 : index
    %8 = vector.load %arg2[%c0_6, %c0_7, %c0_8] : memref<1x16x16xf32, #tpu.memory_space<vmem>>, vector<1x16x16xf32>
    %cst_9 = arith.constant dense<0.000000e+00> : vector<1x16xf32>
    %9 = vector.multi_reduction <add>, %8, %cst_9 [2] : vector<1x16x16xf32> to vector<1x16xf32>
    %10 = vector.shape_cast %9 : vector<1x16xf32> to vector<1x16x1xf32>
    %cst_10 = arith.constant 1.000000e+00 : f32
    %11 = vector.broadcast %cst_10 : f32 to vector<1x16x1xf32>
    %12 = arith.addf %10, %11 : vector<1x16x1xf32>
    %13 = math.rsqrt %12 : vector<1x16x1xf32>
    %14 = arith.mulf %13, %13 : vector<1x16x1xf32>
    %15 = vector.broadcast %13 : vector<1x16x1xf32> to vector<1x16x128xf32>
    %16 = arith.mulf %15, %7 : vector<1x16x128xf32>
    "tpu.trace_start"() <{level = 10 : i32, message = "bij,bjo->bio"}> : () -> ()
    %cst_11 = arith.constant dense<0.000000e+00> : vector<1x16x128xf32>
    %17 = tpu.matmul %8, %16, %cst_11 {dimension_numbers = #tpu.dot_dimension_numbers<[2], [1], [1], [2], [0, 0, 0, 1, 1, 2], [0], [0]>} : vector<1x16x16xf32>, vector<1x16x128xf32>, vector<1x16x128xf32> -> vector<1x16x128xf32>
    "tpu.trace_stop"() : () -> ()
    %18 = vector.broadcast %13 : vector<1x16x1xf32> to vector<1x16x128xf32>
    %19 = arith.mulf %18, %17 : vector<1x16x128xf32>
    %20 = vector.broadcast %14 : vector<1x16x1xf32> to vector<1x16x128xf32>
    %21 = arith.mulf %20, %7 : vector<1x16x128xf32>
    %22 = arith.addf %19, %21 : vector<1x16x128xf32>
    %cst_12 = arith.constant 0.000000e+00 : f32
    %23 = vector.broadcast %cst_12 : f32 to vector<1x16x128xf32>
    %24 = arith.cmpf oge, %22, %23 : vector<1x16x128xf32>
    %cst_13 = arith.constant 0.00999999977 : f32
    %25 = vector.broadcast %cst_13 : f32 to vector<1x16x128xf32>
    %26 = arith.mulf %25, %22 : vector<1x16x128xf32>
    %27 = arith.select %24, %22, %26 : vector<1x16x128xi1>, vector<1x16x128xf32>
    %c0_14 = arith.constant 0 : index
    %c0_15 = arith.constant 0 : index
    %c0_16 = arith.constant 0 : index
    %28 = vector.load %arg5[%c0_14, %c0_15, %c0_16] : memref<1x16x128xf32, #tpu.memory_space<vmem>>, vector<1x16x128xf32>
    tpu.vector_store %arg5[%c0_14, %c0_15, %c0_16], %27 {strides = array<i32>} : memref<1x16x128xf32, #tpu.memory_space<vmem>>, vector<1x16x128xf32>,
    return
  }
  func.func @transform_0(%arg0: i32) -> (i32, i32, i32) {
    %c0_i32 = arith.constant 0 : i32
    %c0_i32_0 = arith.constant 0 : i32
    %c0_i32_1 = arith.constant 0 : i32
    return %arg0, %c0_i32, %c0_i32_0 : i32, i32, i32
  }
  func.func @transform_1(%arg0: i32) -> (i32, i32, i32) {
    %c0_i32 = arith.constant 0 : i32
    %c0_i32_0 = arith.constant 0 : i32
    %c0_i32_1 = arith.constant 0 : i32
    return %arg0, %c0_i32, %c0_i32_0 : i32, i32, i32
  }
  func.func @transform_2(%arg0: i32) -> (i32, i32) {
    %c0_i32 = arith.constant 0 : i32
    %c0_i32_0 = arith.constant 0 : i32
    %c0_i32_1 = arith.constant 0 : i32
    return %c0_i32, %c0_i32_0 : i32, i32
  }
  func.func @transform_3(%arg0: i32) -> (i32, i32) {
    %c0_i32 = arith.constant 0 : i32
    %c0_i32_0 = arith.constant 0 : i32
    %c0_i32_1 = arith.constant 0 : i32
    return %c0_i32, %c0_i32_0 : i32, i32
  }
  func.func @transform_4(%arg0: i32) -> (i32, i32, i32) {
    %c0_i32 = arith.constant 0 : i32
    %c0_i32_0 = arith.constant 0 : i32
    %c0_i32_1 = arith.constant 0 : i32
    return %arg0, %c0_i32, %c0_i32_0 : i32, i32, i32
  }
}

</mosaic_0001>

<llo_original>
// kernel: tpu_custom_call.1
$region0: #{tpu_custom_call.1}
  #allocation0 [shape = 'u32[]', space=smem, size = 0x4, offset = 0x4, fixed_abs, tag = 'smem constant byte address 0x4 - core index']
  #allocation1 [shape = 'u32[144,128]{1,0:T(1,128)}', space=vmem, size = 0x12000, scoped, tag = 'internal scratch']
  %s0 = inlined_call_operand.hbm [shape: f32[2,16,32], index: 0, kind: input, shape index: {}]
  %s1 = inlined_call_operand.hbm [shape: f32[2,16,16], index: 1, kind: input, shape index: {}]
  %s2 = inlined_call_operand.hbm [shape: f32[32,128], index: 2, kind: input, shape index: {}]
  %s3 = inlined_call_operand.vmem [shape: f32[1,128], index: 3, kind: input, shape index: {}]
  %s4 = inlined_call_operand.hbm [shape: f32[2,16,128], index: 4, kind: output, shape index: {}]
  %s5 = sld [smem:[#allocation0]]
  $region61: #{tpu_custom_call.1} parent=0
    _
  %s7 = ssub.s32 1, %s5
  %s8 = scalar_select 0, %s7, %s5
  $region1: #{tpu_custom_call.1} parent=0
    #allocation2 [shape = 'u8[16384]{0}', space=vmem, size = 0x4000, scoped, tag = 'input window, operand 0']
    #allocation3 [shape = 's32[2]{0}', space=sflag, size = 0x8, scoped, tag = 'scoped memory for tpu_custom_call.1']
    #allocation4 [shape = 's32[2]{0}', space=sflag, size = 0x8, scoped, tag = 'scoped memory for tpu_custom_call.1']
    #allocation5 [shape = 'u8[16384]{0}', space=vmem, size = 0x4000, scoped, tag = 'input window, operand 1']
    #allocation6 [shape = 's32[2]{0}', space=sflag, size = 0x8, scoped, tag = 'scoped memory for tpu_custom_call.1']
    #allocation7 [shape = 'u8[16384]{0}', space=vmem, size = 0x4000, scoped, tag = 'input window, operand 2, single buffered']
    #allocation8 [shape = 'u8[16384]{0}', space=vmem, size = 0x4000, scoped, tag = 'output window, operand 0']
    %9 = vsyncpa [#allocation3], 0
    %s10 = scalar_lea.sflag [#allocation3], 1
    %11 = vsyncpa %s10, 0
    %12 = vsyncpa [#allocation6], 0
    %s13 = scalar_lea.sflag [#allocation6], 1
    %14 = vsyncpa %s13, 0
    %15 = vsyncpa [#allocation4], 0
    %s16 = scalar_lea.sflag [#allocation4], 1
    %17 = vsyncpa %s16, 0
    loop: start=0, step=1, limit=4
    $region2: #{tpu_custom_call.1} parent=1 // loop_pre_header
      _
    $region3: #{tpu_custom_call.1} parent=1 // loop_header
      %s19 = sphi 0, %s23
      %p20 = scmp.ge.s32.totalorder %s19, 4
      %s29 = sphi 0, %s31
      %s32 = sphi 0, %s29
      %s33 = sphi 0, %s32
      %s49 = sphi 0, %s33
      %s55 = sphi 0, %s57
      %s58 = sphi 0, %s55
      %s59 = sphi 0, %s58
      %s75 = sphi 0, %s59
      %s79 = sphi 0, %s79
      %s81 = sphi 0, %s79
      %s82 = sphi 0, %s81
      %s96 = sphi 0, %s82
      %s100 = sphi 0, %s100
      %s102 = sphi 0, %s100
      %s103 = sphi 0, %s102
      %s117 = sphi 0, %s103
      %s123 = sphi 0, %s125
      %s126 = sphi 0, %s123
      %s127 = sphi 0, %s126
      %s143 = sphi 0, %s127
    $region4: #{tpu_custom_call.1} parent=1 // loop_header_branch
      %22 = sbr.rel (%p20) target = $region8
    $region5: #{tpu_custom_call.1} parent=1 // loop_body
      %s24 = ssub.s32 %s19, 1
      %s25 = ssub.s32 %s19, 2
      %s26 = sadd.s32 %s19, 1
      %s27 = ssub.s32 %s19, %s26
      %p28 = scmp.eq.s32.totalorder %s27, 0
      %s30 = sadd.s32 %s29, 1
      %s31 = scalar_select %p28, %s29, %s30
      %p34 = pneg %p28
      %p35 = scmp.eq.s32.totalorder %s19, 1
      %p36 = por %p34, %p35
      %p37 = scmp.ne.s32.totalorder %s29, %s32
      %p38 = scmp.eq.s32.totalorder %s19, 0
      %p39 = por %p37, %p38
      %p40 = scmp.ne.s32.totalorder %s29, %s32
      %p41 = scmp.eq.s32.totalorder %s24, 1
      %p42 = por %p40, %p41
      %p43 = scmp.ne.s32.totalorder %s32, %s33
      %p44 = scmp.eq.s32.totalorder %s24, 0
      %p45 = por %p43, %p44
      %p46 = scmp.ne.s32.totalorder %s32, %s33
      %p47 = scmp.eq.s32.totalorder %s25, 1
      %p48 = por %p46, %p47
      %p50 = scmp.ne.s32.totalorder %s33, %s49
      %p51 = scmp.eq.s32.totalorder %s25, 0
      %p52 = por %p50, %p51
      %s53 = ssub.s32 %s19, %s26
      %p54 = scmp.eq.s32.totalorder %s53, 0
      %s56 = sadd.s32 %s55, 1
      %s57 = scalar_select %p54, %s55, %s56
      %p60 = pneg %p54
      %p61 = scmp.eq.s32.totalorder %s19, 1
      %p62 = por %p60, %p61
      %p63 = scmp.ne.s32.totalorder %s55, %s58
      %p64 = scmp.eq.s32.totalorder %s19, 0
      %p65 = por %p63, %p64
      %p66 = scmp.ne.s32.totalorder %s55, %s58
      %p67 = scmp.eq.s32.totalorder %s24, 1
      %p68 = por %p66, %p67
      %p69 = scmp.ne.s32.totalorder %s58, %s59
      %p70 = scmp.eq.s32.totalorder %s24, 0
      %p71 = por %p69, %p70
      %p72 = scmp.ne.s32.totalorder %s58, %s59
      %p73 = scmp.eq.s32.totalorder %s25, 1
      %p74 = por %p72, %p73
      %p76 = scmp.ne.s32.totalorder %s59, %s75
      %p77 = scmp.eq.s32.totalorder %s25, 0
      %p78 = por %p76, %p77
      %s80 = sadd.s32 %s79, 1
      %p83 = scmp.eq.s32.totalorder %s19, 1
      %p84 = scmp.ne.s32.totalorder %s79, %s81
      %p85 = scmp.eq.s32.totalorder %s19, 0
      %p86 = por %p84, %p85
      %p87 = scmp.ne.s32.totalorder %s79, %s81
      %p88 = scmp.eq.s32.totalorder %s24, 1
      %p89 = por %p87, %p88
      %p90 = scmp.ne.s32.totalorder %s81, %s82
      %p91 = scmp.eq.s32.totalorder %s24, 0
      %p92 = por %p90, %p91
      %p93 = scmp.ne.s32.totalorder %s81, %s82
      %p94 = scmp.eq.s32.totalorder %s25, 1
      %p95 = por %p93, %p94
      %p97 = scmp.ne.s32.totalorder %s82, %s96
      %p98 = scmp.eq.s32.totalorder %s25, 0
      %p99 = por %p97, %p98
      %s101 = sadd.s32 %s100, 1
      %p104 = scmp.eq.s32.totalorder %s19, 1
      %p105 = scmp.ne.s32.totalorder %s100, %s102
      %p106 = scmp.eq.s32.totalorder %s19, 0
      %p107 = por %p105, %p106
      %p108 = scmp.ne.s32.totalorder %s100, %s102
      %p109 = scmp.eq.s32.totalorder %s24, 1
      %p110 = por %p108, %p109
      %p111 = scmp.ne.s32.totalorder %s102, %s103
      %p112 = scmp.eq.s32.totalorder %s24, 0
      %p113 = por %p111, %p112
      %p114 = scmp.ne.s32.totalorder %s102, %s103
      %p115 = scmp.eq.s32.totalorder %s25, 1
      %p116 = por %p114, %p115
      %p118 = scmp.ne.s32.totalorder %s103, %s117
      %p119 = scmp.eq.s32.totalorder %s25, 0
      %p120 = por %p118, %p119
      %s121 = ssub.s32 %s19, %s26
      %p122 = scmp.eq.s32.totalorder %s121, 0
      %s124 = sadd.s32 %s123, 1
      %s125 = scalar_select %p122, %s123, %s124
      %p128 = pneg %p122
      %p129 = scmp.eq.s32.totalorder %s19, 1
      %p130 = por %p128, %p129
      %p131 = scmp.ne.s32.totalorder %s123, %s126
      %p132 = scmp.eq.s32.totalorder %s19, 0
      %p133 = por %p131, %p132
      %p134 = scmp.ne.s32.totalorder %s123, %s126
      %p135 = scmp.eq.s32.totalorder %s24, 1
      %p136 = por %p134, %p135
      %p137 = scmp.ne.s32.totalorder %s126, %s127
      %p138 = scmp.eq.s32.totalorder %s24, 0
      %p139 = por %p137, %p138
      %p140 = scmp.ne.s32.totalorder %s126, %s127
      %p141 = scmp.eq.s32.totalorder %s25, 1
      %p142 = por %p140, %p141
      %p144 = scmp.ne.s32.totalorder %s127, %s143
      %p145 = scmp.eq.s32.totalorder %s25, 0
      %p146 = por %p144, %p145
      %p147 = scmp.le.s32.totalorder 1, %s19
      %p148 = scmp.lt.s32.totalorder %s19, 3
      %p149 = pnand %p147, %p148
      %p150 = pneg %p149
      // Predicated region
      $region9: #{tpu_custom_call.1} parent=5 // pred_check
        _
      $region10: #{tpu_custom_call.1} parent=5 // pred_check_branch
        %152 = sbr.rel (%p149) target = $region12
      $region11: #{tpu_custom_call.1} parent=5 // pred_region
        %s153 = ssub.s32 %s19, 1
        // Predicated region
        $region13: #{tpu_custom_call.1} parent=11 // pred_check
          %p154 = pneg %p92
        $region14: #{tpu_custom_call.1} parent=11 // pred_check_branch
          %156 = sbr.rel (%p154) target = $region16
        $region15: #{tpu_custom_call.1} parent=11 // pred_region
          %s158 = ssub.s32 512, 512
          %159 = vsyncadd [#allocation6], %s158
          %s160 = sshll.u32 [#allocation7], 4
          %s161 = int_to_ptr.vmem [resolvable:$true] %s160
          %166 = dma.hbm_to_vmem [thread:$0]  %s2, 512, %s161, [#allocation6], 128, 128, 8
        $region16: #{tpu_custom_call.1} parent=11 // pred_fallthru
          _
        // Predicated region
        $region17: #{tpu_custom_call.1} parent=11 // pred_check
          %p167 = pneg %p113
        $region18: #{tpu_custom_call.1} parent=11 // pred_check_branch
          %169 = sbr.rel (%p167) target = $region20
        $region19: #{tpu_custom_call.1} parent=11 // pred_region
          _
        $region20: #{tpu_custom_call.1} parent=11 // pred_fallthru
          _
      $region12: #{tpu_custom_call.1} parent=5 // pred_fallthru
        _
      %p170 = scmp.lt.s32.totalorder %s19, 2
      // Predicated region
      $region21: #{tpu_custom_call.1} parent=5 // pred_check
        %p171 = pneg %p170
      $region22: #{tpu_custom_call.1} parent=5 // pred_check_branch
        %173 = sbr.rel (%p171) target = $region24
      $region23: #{tpu_custom_call.1} parent=5 // pred_region
        // Predicated region
        $region25: #{tpu_custom_call.1} parent=23 // pred_check
          %p174 = pneg %p39
        $region26: #{tpu_custom_call.1} parent=23 // pred_check_branch
          %176 = sbr.rel (%p174) target = $region28
        $region27: #{tpu_custom_call.1} parent=23 // pred_region
          %s177 = sand.u32 %s29, 1
          %s178 = scalar_lea.sflag [#allocation3], %s177
          %s179 = sand.u32 %s29, 1
          %s180 = smul.addr %s179, 16
          %s181 = scalar_lea.vmem [#allocation2], %s180
          %s183 = ssub.s32 256, 256
          %184 = vsyncadd %s178, %s183
          %s185 = smul.addr %s19, 2
          %s186 = smul.addr %s185, 128
          %s187 = scalar_lea.hbm %s0, %s186
          %s188 = sshll.u32 %s181, 4
          %s189 = int_to_ptr.vmem [resolvable:$true] %s188
          %194 = dma.hbm_to_vmem [thread:$0]  %s187, 256, %s189, %s178, 128, 128, 8
        $region28: #{tpu_custom_call.1} parent=23 // pred_fallthru
          _
        // Predicated region
        $region29: #{tpu_custom_call.1} parent=23 // pred_check
          %p195 = pneg %p65
        $region30: #{tpu_custom_call.1} parent=23 // pred_check_branch
          %197 = sbr.rel (%p195) target = $region32
        $region31: #{tpu_custom_call.1} parent=23 // pred_region
          %s198 = sand.u32 %s19, 1
          %s199 = scalar_lea.sflag [#allocation6], %s198
          %s200 = sand.u32 %s55, 1
          %s201 = smul.addr %s200, 16
          %s202 = scalar_lea.vmem [#allocation5], %s201
          %s204 = ssub.s32 256, 256
          %205 = vsyncadd %s199, %s204
          %s206 = smul.addr %s19, 2
          %s207 = smul.addr %s206, 128
          %s208 = scalar_lea.hbm %s1, %s207
          %s209 = sshll.u32 %s202, 4
          %s210 = int_to_ptr.vmem [resolvable:$true] %s209
          %215 = dma.hbm_to_vmem [thread:$0]  %s208, 256, %s210, %s199, 128, 128, 8
        $region32: #{tpu_custom_call.1} parent=23 // pred_fallthru
          _
      $region24: #{tpu_custom_call.1} parent=5 // pred_fallthru
        _
      %p216 = scmp.le.s32.totalorder 1, %s19
      %p217 = scmp.lt.s32.totalorder %s19, 3
      %p218 = pnand %p216, %p217
      %p219 = pneg %p218
      // Predicated region
      $region33: #{tpu_custom_call.1} parent=5 // pred_check
        _
      $region34: #{tpu_custom_call.1} parent=5 // pred_check_branch
        %221 = sbr.rel (%p218) target = $region36
      $region35: #{tpu_custom_call.1} parent=5 // pred_region
        %s222 = ssub.s32 %s19, 1
        %s223 = sand.u32 %s32, 1
        %s224 = scalar_lea.sflag [#allocation3], %s223
        %s225 = sand.u32 %s32, 1
        %s226 = smul.addr %s225, 16
        %s227 = scalar_lea.vmem [#allocation2], %s226
        // Predicated region
        $region37: #{tpu_custom_call.1} parent=35 // pred_check
          %p228 = pneg %p45
        $region38: #{tpu_custom_call.1} parent=35 // pred_check_branch
          %230 = sbr.rel (%p228) target = $region40
        $region39: #{tpu_custom_call.1} parent=35 // pred_region
          %231 = dma.done %s224, 256
        $region40: #{tpu_custom_call.1} parent=35 // pred_fallthru
          _
        %s232 = sand.u32 %s24, 1
        %s233 = scalar_lea.sflag [#allocation6], %s232
        %s234 = sand.u32 %s58, 1
        %s235 = smul.addr %s234, 16
        %s236 = scalar_lea.vmem [#allocation5], %s235
        // Predicated region
        $region41: #{tpu_custom_call.1} parent=35 // pred_check
          %p237 = pneg %p71
        $region42: #{tpu_custom_call.1} parent=35 // pred_check_branch
          %239 = sbr.rel (%p237) target = $region44
        $region43: #{tpu_custom_call.1} parent=35 // pred_region
          %240 = dma.done %s233, 256
        $region44: #{tpu_custom_call.1} parent=35 // pred_fallthru
          _
        // Predicated region
        $region45: #{tpu_custom_call.1} parent=35 // pred_check
          %p241 = pneg %p92
        $region46: #{tpu_custom_call.1} parent=35 // pred_check_branch
          %243 = sbr.rel (%p241) target = $region48
        $region47: #{tpu_custom_call.1} parent=35 // pred_region
          %244 = dma.done [#allocation6], 512
        $region48: #{tpu_custom_call.1} parent=35 // pred_fallthru
          _
        %s245 = sand.u32 %s32, 1
        %s246 = scalar_lea.sflag [#allocation3], %s245
        %s247 = sand.u32 %s32, 1
        %s248 = smul.addr %s247, 16
        %s249 = scalar_lea.vmem [#allocation2], %s248
        %p250 = pneg %p45
        %p251 = pneg %p42
        %s252 = sand.u32 %s24, 1
        %s253 = scalar_lea.sflag [#allocation6], %s252
        %s254 = sand.u32 %s58, 1
        %s255 = smul.addr %s254, 16
        %s256 = scalar_lea.vmem [#allocation5], %s255
        %p257 = pneg %p71
        %p258 = pneg %p68
        %p259 = pneg %p92
        %p260 = pneg %p89
        %p261 = pneg %p113
        %p262 = pneg %p110
        %p263 = pneg %p139
        %p264 = pneg %p136
        %s265 = sand.u32 %s126, 1
        %s266 = scalar_lea.sflag [#allocation4], %s265
        %s267 = sand.u32 %s126, 1
        %s268 = smul.addr %s267, 16
        %s269 = scalar_lea.vmem [#allocation8], %s268
        %v270 = vld [vmem:[%s227] sm:$0xff]
        %v271 = vld [vmem:[%s227 + $0x8] sm:$0xff]
        %v272 = vld [vmem:[#allocation7] sm:$0xff]
        %v273 = vld [vmem:[#allocation7 + $0x8] sm:$0xff]
        %v274 = vld [vmem:[#allocation7 + $0x10] sm:$0xff]
        %v275 = vld [vmem:[#allocation7 + $0x18] sm:$0xff]
        %v276 = vld [vmem:[%s3] sm:$0x1]
        %v278 = vlaneseq
        %v279 = vshrl.u32 %v278, 7
        %v280 = vsub.s32 0, %v279
        %v281 = vrot.slane %v276, %v280
        %vm283 = vcmask 261120
        %v285 = vsel %vm283, %v270, 0
        %v288 = vsel %vm283, %v271, 0
        %290 = vmatprep.subr.mxu0 0.0
        %291 = vmatpush1.msra.mxu0 %v272
        %292 = vmatprep.subr.mxu0 0.0
        %293 = vmatpush1.msra.mxu0 %v273
        %294 = vmatprep.subr.mxu0 0.0
        %295 = vmatpush1.msra.mxu0 %v274
        %296 = vmatprep.subr.mxu0 0.0
        %297 = vmatpush1.msra.mxu0 %v275
        %298 = vmatprep.subr.mxu0 0.0
        %299 = vmatpush1.msra.mxu0 0.0
        %300 = vmatprep.subr.mxu0 0.0
        %301 = vmatpush1.msra.mxu0 0.0
        %302 = vmatprep.subr.mxu0 0.0
        %303 = vmatpush1.msra.mxu0 0.0
        %304 = vmatprep.subr.mxu0 0.0
        %305 = vmatpush1.msra.mxu0 0.0
        %306 = vmatprep.subr.mxu0 0.0
        %307 = vmatpush1.msra.mxu0 0.0
        %308 = vmatprep.subr.mxu0 0.0
        %309 = vmatpush1.msra.mxu0 0.0
        %310 = vmatprep.subr.mxu0 0.0
        %311 = vmatpush1.msra.mxu0 0.0
        %312 = vmatprep.subr.mxu0 0.0
        %313 = vmatpush1.msra.mxu0 0.0
        %314 = vmatprep.subr.mxu0 0.0
        %315 = vmatpush1.msra.mxu0 0.0
        %316 = vmatprep.subr.mxu0 0.0
        %317 = vmatpush1.msra.mxu0 0.0
        %318 = vmatprep.subr.mxu0 0.0
        %319 = vmatpush1.msra.mxu0 0.0
        %320 = vmatprep.subr.mxu0 0.0
        %321 = vmatpush1.msra.mxu0 0.0
        %322 = vmatprep.subr.mxu0 0.0
        %323 = vmatpush1.msra.mxu0 0.0
        %324 = vmatprep.subr.mxu0 0.0
        %325 = vmatpush1.msra.mxu0 0.0
        %326 = vmatprep.subr.mxu0 0.0
        %327 = vmatpush1.msra.mxu0 0.0
        %328 = vmatprep.subr.mxu0 0.0
        %329 = vmatpush1.msra.mxu0 0.0
        %330 = vmatprep.subr.mxu0 0.0
        %331 = vmatpush1.msra.mxu0 0.0
        %332 = vmatprep.subr.mxu0 0.0
        %333 = vmatpush1.msra.mxu0 0.0
        %334 = vmatprep.subr.mxu0 0.0
        %335 = vmatpush1.msra.mxu0 0.0
        %336 = vmatprep.subr.mxu0 0.0
        %337 = vmatpush1.msra.mxu0 0.0
        %338 = vmatprep.subr.mxu0 0.0
        %339 = vmatpush1.msra.mxu0 0.0
        %340 = vmatprep.subr.mxu0 0.0
        %341 = vmatpush1.msra.mxu0 0.0
        %342 = vmatprep.subr.mxu0 0.0
        %343 = vmatpush1.msra.mxu0 0.0
        %344 = vmatprep.subr.mxu0 0.0
        %345 = vmatpush1.msra.mxu0 0.0
        %346 = vmatprep.subr.mxu0 0.0
        %347 = vmatpush1.msra.mxu0 0.0
        %348 = vmatprep.subr.mxu0 0.0
        %349 = vmatpush1.msra.mxu0 0.0
        %350 = vmatprep.subr.mxu0 0.0
        %351 = vmatpush1.msra.mxu0 0.0
        %352 = vmatprep.subr.mxu0 0.0
        %353 = vmatpush1.msra.mxu0 0.0
        %354 = vmatprep.mubr.f32.mxu0 0.0
        %355 = vmatmul.mubr.f32.gmra.mrb[0].mxu0 %v285
        %v356 = vpop.f32.mrb[0].mxu0
        %v357 = vadd.f32 %v281, %v356
        %v358 = vpop.f32.mrb[0].mxu0
        %359 = vmatprep.mubr.f32.mxu0 0.0
        %360 = vmatmul.mubr.f32.gmra.mrb[0].mxu0 %v288
        %v361 = vpop.f32.mrb[0].mxu0
        %v362 = vadd.f32 %v281, %v361
        %v363 = vpop.f32.mrb[0].mxu0
        %364 = vdwg.mxu0
        %v365 = vld [vmem:[%s236] sm:$0xff]
        %v366 = vld [vmem:[%s236 + $0x8] sm:$0xff]
        %vm367 = vcmask 130048
        %v368 = vsel %vm367, %v365, 0.0
        %369 = vadd.xlane.f32.xlu0 %v368
        %v370 = vpop.xlane.xlu0 %369
        %v371 = vsel %vm367, %v366, 0.0
        %372 = vadd.xlane.f32.xlu0 %v371
        %v373 = vpop.xlane.xlu0 %372
        %v374 = vadd.f32 %v370, 1.0
        %v375 = vadd.f32 %v373, 1.0
        %v376 = vrsqrt.pop %v374
        %v377 = vrsqrt.pop %v375
        %v378 = vmul.f32 %v376, %v376
        %v379 = vmul.f32 %v377, %v377
        %v380 = vmul.f32 %v376, %v357
        %v381 = vmul.f32 %v377, %v362
        %v383 = vsel %vm367, %v365, 0
        %v386 = vsel %vm367, %v366, 0
        %388 = vmatprep.subr.mxu0 0.0
        %389 = vmatpush1.msra.mxu0 %v380
        %390 = vmatprep.subr.mxu0 0.0
        %391 = vmatpush1.msra.mxu0 %v381
        %392 = vmatprep.subr.mxu0 0.0
        %393 = vmatpush1.msra.mxu0 0.0
        %394 = vmatprep.subr.mxu0 0.0
        %395 = vmatpush1.msra.mxu0 0.0
        %396 = vmatprep.subr.mxu0 0.0
        %397 = vmatpush1.msra.mxu0 0.0
        %398 = vmatprep.subr.mxu0 0.0
        %399 = vmatpush1.msra.mxu0 0.0
        %400 = vmatprep.subr.mxu0 0.0
        %401 = vmatpush1.msra.mxu0 0.0
        %402 = vmatprep.subr.mxu0 0.0
        %403 = vmatpush1.msra.mxu0 0.0
        %404 = vmatprep.subr.mxu0 0.0
        %405 = vmatpush1.msra.mxu0 0.0
        %406 = vmatprep.subr.mxu0 0.0
        %407 = vmatpush1.msra.mxu0 0.0
        %408 = vmatprep.subr.mxu0 0.0
        %409 = vmatpush1.msra.mxu0 0.0
        %410 = vmatprep.subr.mxu0 0.0
        %411 = vmatpush1.msra.mxu0 0.0
        %412 = vmatprep.subr.mxu0 0.0
        %413 = vmatpush1.msra.mxu0 0.0
        %414 = vmatprep.subr.mxu0 0.0
        %415 = vmatpush1.msra.mxu0 0.0
        %416 = vmatprep.subr.mxu0 0.0
        %417 = vmatpush1.msra.mxu0 0.0
        %418 = vmatprep.subr.mxu0 0.0
        %419 = vmatpush1.msra.mxu0 0.0
        %420 = vmatprep.subr.mxu0 0.0
        %421 = vmatpush1.msra.mxu0 0.0
        %422 = vmatprep.subr.mxu0 0.0
        %423 = vmatpush1.msra.mxu0 0.0
        %424 = vmatprep.subr.mxu0 0.0
        %425 = vmatpush1.msra.mxu0 0.0
        %426 = vmatprep.subr.mxu0 0.0
        %427 = vmatpush1.msra.mxu0 0.0
        %428 = vmatprep.subr.mxu0 0.0
        %429 = vmatpush1.msra.mxu0 0.0
        %430 = vmatprep.subr.mxu0 0.0
        %431 = vmatpush1.msra.mxu0 0.0
        %432 = vmatprep.subr.mxu0 0.0
        %433 = vmatpush1.msra.mxu0 0.0
        %434 = vmatprep.subr.mxu0 0.0
        %435 = vmatpush1.msra.mxu0 0.0
        %436 = vmatprep.subr.mxu0 0.0
        %437 = vmatpush1.msra.mxu0 0.0
        %438 = vmatprep.subr.mxu0 0.0
        %439 = vmatpush1.msra.mxu0 0.0
        %440 = vmatprep.subr.mxu0 0.0
        %441 = vmatpush1.msra.mxu0 0.0
        %442 = vmatprep.subr.mxu0 0.0
        %443 = vmatpush1.msra.mxu0 0.0
        %444 = vmatprep.subr.mxu0 0.0
        %445 = vmatpush1.msra.mxu0 0.0
        %446 = vmatprep.subr.mxu0 0.0
        %447 = vmatpush1.msra.mxu0 0.0
        %448 = vmatprep.subr.mxu0 0.0
        %449 = vmatpush1.msra.mxu0 0.0
        %450 = vmatprep.subr.mxu0 0.0
        %451 = vmatpush1.msra.mxu0 0.0
        %452 = vmatprep.mubr.f32.mxu0 0.0
        %453 = vmatmul.mubr.f32.gmra.mrb[0].mxu0 %v383
        %v454 = vpop.f32.mrb[0].mxu0
        %v455 = vadd.f32 0.0, %v454
        %v456 = vpop.f32.mrb[0].mxu0
        %457 = vmatprep.mubr.f32.mxu0 0.0
        %458 = vmatmul.mubr.f32.gmra.mrb[0].mxu0 %v386
        %v459 = vpop.f32.mrb[0].mxu0
        %v460 = vadd.f32 0.0, %v459
        %v461 = vpop.f32.mrb[0].mxu0
        %462 = vdwg.mxu0
        %v463 = vmul.f32 %v376, %v455
        %v464 = vmul.f32 %v377, %v460
        %v465 = vmul.f32 %v378, %v357
        %v466 = vmul.f32 %v379, %v362
        %v467 = vadd.f32 %v463, %v465
        %v468 = vadd.f32 %v464, %v466
        %vm469 = vcmp.ge.f32.partialorder %v467, 0.0
        %vm470 = vcmp.ge.f32.partialorder %v468, 0.0
        %v471 = vmul.f32 %v467, 0.01
        %v472 = vmul.f32 %v468, 0.01
        %v473 = vsel %vm469, %v467, %v471
        %v474 = vsel %vm470, %v468, %v472
        %475 = vst [vmem:[%s269] sm:$0xff] %v473
        %476 = vst [vmem:[%s269 + $0x8] sm:$0xff] %v474
        %s477 = sand.u32 %s126, 1
        %s478 = scalar_lea.sflag [#allocation4], %s477
        %s479 = sand.u32 %s126, 1
        %s480 = smul.addr %s479, 16
        %s481 = scalar_lea.vmem [#allocation8], %s480
        // Predicated region
        $region49: #{tpu_custom_call.1} parent=35 // pred_check
          %p482 = pneg %p136
        $region50: #{tpu_custom_call.1} parent=35 // pred_check_branch
          %484 = sbr.rel (%p482) target = $region52
        $region51: #{tpu_custom_call.1} parent=35 // pred_region
          %s486 = ssub.s32 256, 256
          %487 = vsyncadd %s478, %s486
          %s488 = smul.addr %s24, 2
          %s489 = smul.addr %s488, 128
          %s490 = scalar_lea.hbm %s4, %s489
          %s491 = sshll.u32 %s481, 4
          %s492 = int_to_ptr.vmem [resolvable:$true] %s491
          %497 = dma.vmem_to_hbm [thread:$0]  %s492, 256, %s490, %s478, 128, 128, 8
        $region52: #{tpu_custom_call.1} parent=35 // pred_fallthru
          _
      $region36: #{tpu_custom_call.1} parent=5 // pred_fallthru
        _
      %p498 = scmp.le.s32.totalorder 2, %s19
      // Predicated region
      $region53: #{tpu_custom_call.1} parent=5 // pred_check
        %p499 = pneg %p498
      $region54: #{tpu_custom_call.1} parent=5 // pred_check_branch
        %501 = sbr.rel (%p499) target = $region56
      $region55: #{tpu_custom_call.1} parent=5 // pred_region
        %s502 = ssub.s32 %s19, 2
        // Predicated region
        $region57: #{tpu_custom_call.1} parent=55 // pred_check
          %p503 = pneg %p142
        $region58: #{tpu_custom_call.1} parent=55 // pred_check_branch
          %505 = sbr.rel (%p503) target = $region60
        $region59: #{tpu_custom_call.1} parent=55 // pred_region
          %s506 = sand.u32 %s127, 1
          %s507 = scalar_lea.sflag [#allocation4], %s506
          %s508 = sand.u32 %s127, 1
          %s509 = smul.addr %s508, 16
          %s510 = scalar_lea.vmem [#allocation8], %s509
          %511 = dma.done %s507, 256
        $region60: #{tpu_custom_call.1} parent=55 // pred_fallthru
          _
      $region56: #{tpu_custom_call.1} parent=5 // pred_fallthru
        _
    $region6: #{tpu_custom_call.1} parent=1 // loop_footer
      %s23 = sadd.s32 1, %s19
    $region7: #{tpu_custom_call.1} parent=1 // loop_footer_branch
      %18 = sbr.rel target = $region3
    $region8: #{tpu_custom_call.1} parent=1 // loop_exit
      _
    %512 = vsyncpa [#allocation3], 1
    %s513 = scalar_lea.sflag [#allocation3], 1
    %514 = vsyncpa %s513, 1
    %515 = vsyncpa [#allocation6], 1
    %s516 = scalar_lea.sflag [#allocation6], 1
    %517 = vsyncpa %s516, 1
    %518 = vsyncpa [#allocation4], 1
    %s519 = scalar_lea.sflag [#allocation4], 1
    %520 = vsyncpa %s519, 1

</llo_original>
